<compile_context>
chip_gen: v7x
topology: tpu7x:2x2x1
jax: 0.10.0
libtpu: 0.0.40
codegen_flags: <defaults>
</compile_context>

<pallas_src>
import functools

import jax
import jax.numpy as jnp
from jax.experimental import pallas as pl
from jax.experimental.pallas import tpu as pltpu

LANE = 128


def _round_up(x, m):
    return ((x + m - 1) // m) * m


# ----------------------------------------------------------------------------
# Fused forward kernel: one graph per grid step, V resident in VMEM/vregs.
# ----------------------------------------------------------------------------

def _fused_forward_kernel(
    a_ref,       # [1, N, N]      bf16  adjacency (this graph)
    x_ref,       # [1, N, Kp]     bf16  raw feats ++ pos_enc, zero-padded to Kp
    w_in_ref,    # [Kp, Dp]       bf16  stacked TransInput / pos-encode weight
    b_in_ref,    # [1, Dp]        f32
    w12_ref,     # [L, 2*Dp, Dp]  bf16  per-layer [W1; W2] stacked along K
    bs_ref,      # [L, 1, Dp]     f32
    w_out_ref,   # [Dp, Cp]       bf16  TransOutput classifier weight
    b_out_ref,   # [1, Cp]        f32
    o_ref,       # [1, 1, Cp]     f32   per-graph scores (padded classes)
):
    a = a_ref[0]                                                  # [N, N]
    x = x_ref[0]                                                  # [N, Kp]

    # trans_input + position_encoding (weights pre-stacked & padded at init)
    v = (
        jnp.dot(x, w_in_ref[...], preferred_element_type=jnp.float32)
        + b_in_ref[...]
    )                                                             # [N, Dp] f32

    n_layers = w12_ref.shape[0]
    # TODO(synk): real Cell topology depends on `genotypes`; a fixed residual
    # message-passing cell is used here, and edge features E are unused.
    for l in range(n_layers):
        v_bf = v.astype(jnp.bfloat16)
        agg = jnp.dot(a, v_bf, preferred_element_type=jnp.float32)       # A @ V
        cat = jnp.concatenate([agg.astype(jnp.bfloat16), v_bf], axis=-1)  # [N, 2Dp]
        h = (
            jnp.dot(cat, w12_ref[l], preferred_element_type=jnp.float32)
            + bs_ref[l]
        )
        v = v + jnp.maximum(h, 0.0)                               # residual ReLU cell

    # trans_output: per-graph mean pool (sublane reduce on XLU) + classifier.
    # TODO(synk): if graphs are padded with dummy nodes, a per-graph node mask /
    # true node count is needed here and in A@V; not modeled.
    pooled = jnp.sum(v, axis=0, keepdims=True) * (1.0 / a.shape[0])       # [1, Dp]
    o_ref[0] = (
        jnp.dot(pooled.astype(jnp.bfloat16), w_out_ref[...],
                preferred_element_type=jnp.float32)
        + b_out_ref[...]
    )


# ----------------------------------------------------------------------------
# Parameter construction (all padding / stacking / folding hoisted here).
# ----------------------------------------------------------------------------

def init_params(key, in_dim, node_dim, pos_encode, nb_layers, n_classes):
    Dp = _round_up(node_dim, LANE)
    Cp = _round_up(n_classes, LANE)
    Kp = _round_up(in_dim + pos_encode, LANE)

    ks = jax.random.split(key, 4 + 3 * nb_layers)

    # raw weights
    w_in = jax.random.normal(ks[0], (in_dim, node_dim), jnp.float32) * 0.1
    w_pos = jax.random.normal(ks[1], (pos_encode, node_dim), jnp.float32) * 0.1

    # fold pos-encode linear into the input projection; zero-pad to [Kp, Dp]
    w_in_cat = jnp.concatenate([w_in, w_pos], axis=0)             # [in+P, D]
    w_in_p = jnp.zeros((Kp, Dp), jnp.float32)
    w_in_p = w_in_p.at[: in_dim + pos_encode, :node_dim].set(w_in_cat)
    b_in_p = jnp.zeros((1, Dp), jnp.float32)                      # (b_in + b_pos) = 0

    # per-layer cell weights, stacked [W1; W2] along K and zero-padded
    w12_list, b_list = [], []
    for i in range(nb_layers):
        w1 = jax.random.normal(ks[2 + 3 * i], (node_dim, node_dim), jnp.float32) * 0.1
        w2 = jax.random.normal(ks[3 + 3 * i], (node_dim, node_dim), jnp.float32) * 0.1
        w12 = jnp.zeros((2 * Dp, Dp), jnp.float32)
        w12 = w12.at[:node_dim, :node_dim].set(w1)                # aggregated (A@V) path
        w12 = w12.at[Dp:Dp + node_dim, :node_dim].set(w2)         # residual (V) path
        w12_list.append(w12)
        b_list.append(jnp.zeros((1, Dp), jnp.float32))

    w_out = jax.random.normal(ks[-2], (node_dim, n_classes), jnp.float32) * 0.1
    w_out_p = jnp.zeros((Dp, Cp), jnp.float32).at[:node_dim, :n_classes].set(w_out)
    b_out_p = jnp.zeros((1, Cp), jnp.float32)

    return {
        "w_in": w_in_p.astype(jnp.bfloat16),          # [Kp, Dp]
        "b_in": b_in_p,                               # [1, Dp]
        "w12": jnp.stack(w12_list).astype(jnp.bfloat16),  # [L, 2Dp, Dp]
        "bs": jnp.stack(b_list),                      # [L, 1, Dp]
        "w_out": w_out_p.astype(jnp.bfloat16),        # [Dp, Cp]
        "b_out": b_out_p,                             # [1, Cp]
    }


# ----------------------------------------------------------------------------
# Model wrapper (mirrors Model_Train.forward)
# ----------------------------------------------------------------------------

@functools.partial(jax.jit, static_argnames=("n_classes",))
def model_train_forward(params, A, X_raw, E, pos_enc, *, n_classes):
    """Pallas equivalent of Model_Train.forward (E carried through unused)."""
    del E  # TODO(synk): edge features are not consumed by this fixed cell.
    B, N, in_dim = X_raw.shape
    Kp, Dp = params["w_in"].shape
    Cp = params["w_out"].shape[1]
    L = params["w12"].shape[0]

    # per-call activation prep: concat raw feats ++ pos_enc, pad lanes to Kp, bf16
    if pos_enc is not None and pos_enc.shape[-1] > 0:
        x = jnp.concatenate([X_raw, pos_enc], axis=-1)            # [B, N, in+P]
    else:
        x = X_raw
    k_in = x.shape[-1]
    x = jnp.pad(x, ((0, 0), (0, 0), (0, Kp - k_in))).astype(jnp.bfloat16)  # [B,N,Kp]
    a = A.astype(jnp.bfloat16)                                             # [B,N,N]

    # advisory cost estimate (per-graph, batched over the grid)
    flops = int(
        B * (2 * N * Kp * Dp                                   # input projection
             + L * (2 * N * N * Dp + 2 * N * (2 * Dp) * Dp)    # cells: A@V + fused W
             + 2 * Dp * Cp)                                     # classifier
    )
    bytes_accessed = int(
        2 * (a.size + x.size + params["w_in"].size + params["w12"].size
             + params["w_out"].size)
        + 4 * (params["b_in"].size + params["bs"].size + params["b_out"].size + B * Cp)
    )

    out = pl.pallas_call(
        _fused_forward_kernel,
        out_shape=jax.ShapeDtypeStruct((B, 1, Cp), jnp.float32),
        grid=(B,),
        in_specs=[
            pl.BlockSpec((1, N, N), lambda b: (b, 0, 0)),          # A (per graph)
            pl.BlockSpec((1, N, Kp), lambda b: (b, 0, 0)),         # X (per graph)
            pl.BlockSpec((Kp, Dp), lambda b: (0, 0)),              # W_in (resident)
            pl.BlockSpec((1, Dp), lambda b: (0, 0)),               # b_in
            pl.BlockSpec((L, 2 * Dp, Dp), lambda b: (0, 0, 0)),    # cell weights
            pl.BlockSpec((L, 1, Dp), lambda b: (0, 0, 0)),         # cell biases
            pl.BlockSpec((Dp, Cp), lambda b: (0, 0)),              # W_out
            pl.BlockSpec((1, Cp), lambda b: (0, 0)),               # b_out
        ],
        out_specs=pl.BlockSpec((1, 1, Cp), lambda b: (b, 0, 0)),
        compiler_params=pltpu.CompilerParams(
            dimension_semantics=("parallel",),    # batch split across TCs on v7x
            vmem_limit_bytes=32 << 20,
        ),
        cost_estimate=pl.CostEstimate(
            flops=flops, transcendentals=0, bytes_accessed=bytes_accessed
        ),
    )(a, x, params["w_in"], params["b_in"], params["w12"], params["bs"],
      params["w_out"], params["b_out"])

    return out.reshape(B, Cp)[:, :n_classes]


# ----------------------------------------------------------------------------
# Main
# ----------------------------------------------------------------------------

if __name__ == "__main__":
    B, N = 2, 16          # batch of graphs, nodes per graph
    in_dim = 8            # raw node feature dim
    node_dim = 32         # args.node_dim
    pos_encode = 4        # args.pos_encode
    nb_layers = 3         # args.nb_layers
    n_classes = 10

    key = jax.random.PRNGKey(0)
    k_a, k_x, k_e, k_p, k_w = jax.random.split(key, 5)

    # dense random adjacency (row-normalized), node feats, edge feats, pos encodings
    A = (jax.random.uniform(k_a, (B, N, N)) > 0.5).astype(jnp.float32)
    A = A / jnp.maximum(A.sum(-1, keepdims=True), 1.0)
    X_raw = jax.random.normal(k_x, (B, N, in_dim), jnp.float32)
    E = jax.random.normal(k_e, (B, N, N), jnp.float32)
    pos_enc = jax.random.normal(k_p, (B, N, pos_encode), jnp.float32)

    params = init_params(k_w, in_dim, node_dim, pos_encode, nb_layers, n_classes)

    scores = model_train_forward(params, A, X_raw, E, pos_enc, n_classes=n_classes)
    scores = jax.block_until_ready(scores)

    assert scores.shape == (B, n_classes)
    assert bool(jnp.all(jnp.isfinite(scores)))
    print("KERNEL_OK")
</pallas_src>

<mosaic_0001>
module attributes {stable_mosaic.version = 11 : i64} {
  func.func @_fused_forward_kernel(%arg0: i32, %arg1: memref<1x16x16xbf16, #tpu.memory_space<vmem>>, %arg2: memref<1x16x128xbf16, #tpu.memory_space<vmem>>, %arg3: memref<128x128xbf16, #tpu.memory_space<vmem>>, %arg4: memref<1x128xf32, #tpu.memory_space<vmem>>, %arg5: memref<3x256x128xbf16, #tpu.memory_space<vmem>>, %arg6: memref<3x1x128xf32, #tpu.memory_space<vmem>>, %arg7: memref<128x128xbf16, #tpu.memory_space<vmem>>, %arg8: memref<1x128xf32, #tpu.memory_space<vmem>>, %arg9: memref<1x1x128xf32, #tpu.memory_space<vmem>>) attributes {dimension_semantics = [#tpu.dimension_semantics<parallel>], iteration_bounds = array<i64: 2>, scalar_prefetch = 0 : i64, scratch_operands = 0 : i64, tpu.core_type = #tpu.core_type<tc>, window_params = [{transform_indices = @transform_0, window_bounds = array<i64: 1, 16, 16>}, {transform_indices = @transform_1, window_bounds = array<i64: 1, 16, 128>}, {pipeline_mode = #tpu.pipeline_mode<synchronous>, transform_indices = @transform_2, window_bounds = array<i64: 128, 128>}, {pipeline_mode = #tpu.pipeline_mode<synchronous>, transform_indices = @transform_3, window_bounds = array<i64: 1, 128>}, {pipeline_mode = #tpu.pipeline_mode<synchronous>, transform_indices = @transform_4, window_bounds = array<i64: 3, 256, 128>}, {pipeline_mode = #tpu.pipeline_mode<synchronous>, transform_indices = @transform_5, window_bounds = array<i64: 3, 1, 128>}, {pipeline_mode = #tpu.pipeline_mode<synchronous>, transform_indices = @transform_6, window_bounds = array<i64: 128, 128>}, {pipeline_mode = #tpu.pipeline_mode<synchronous>, transform_indices = @transform_7, window_bounds = array<i64: 1, 128>}, {transform_indices = @transform_8, window_bounds = array<i64: 1, 1, 128>}]} {
    %c0 = arith.constant 0 : index
    %c0_0 = arith.constant 0 : index
    %c0_1 = arith.constant 0 : index
    %0 = vector.load %arg1[%c0, %c0_0, %c0_1] : memref<1x16x16xbf16, #tpu.memory_space<vmem>>, vector<1x16x16xbf16>
    %1 = vector.shape_cast %0 : vector<1x16x16xbf16> to vector<16x16xbf16>
    %c0_2 = arith.constant 0 : index
    %c0_3 = arith.constant 0 : index
    %c0_4 = arith.constant 0 : index
    %2 = vector.load %arg2[%c0_2, %c0_3, %c0_4] : memref<1x16x128xbf16, #tpu.memory_space<vmem>>, vector<1x16x128xbf16>
    %3 = vector.shape_cast %2 : vector<1x16x128xbf16> to vector<16x128xbf16>
    %c0_5 = arith.constant 0 : index
    %c0_6 = arith.constant 0 : index
    %4 = vector.load %arg3[%c0_5, %c0_6] : memref<128x128xbf16, #tpu.memory_space<vmem>>, vector<128x128xbf16>
    %cst = arith.constant dense<0.000000e+00> : vector<16x128xf32>
    %5 = tpu.matmul %3, %4, %cst {dimension_numbers = #tpu.dot_dimension_numbers<[1], [0], [0], [1], [0, 0, 1, 1], [], []>} : vector<16x128xbf16>, vector<128x128xbf16>, vector<16x128xf32> -> vector<16x128xf32>
    %c0_7 = arith.constant 0 : index
    %c0_8 = arith.constant 0 : index
    %6 = vector.load %arg4[%c0_7, %c0_8] : memref<1x128xf32, #tpu.memory_space<vmem>>, vector<1x128xf32>
    %7 = vector.broadcast %6 : vector<1x128xf32> to vector<16x128xf32>
    %8 = arith.addf %5, %7 : vector<16x128xf32>
    %9 = arith.truncf %8 : vector<16x128xf32> to vector<16x128xbf16>
    %cst_9 = arith.constant dense<0.000000e+00> : vector<16x128xf32>
    %10 = tpu.matmul %1, %9, %cst_9 {dimension_numbers = #tpu.dot_dimension_numbers<[1], [0], [0], [1], [0, 0, 1, 1], [], []>} : vector<16x16xbf16>, vector<16x128xbf16>, vector<16x128xf32> -> vector<16x128xf32>
    %11 = arith.truncf %10 : vector<16x128xf32> to vector<16x128xbf16>
    %12 = tpu.concatenate %11, %9 in 1 : vector<16x128xbf16>, vector<16x128xbf16> -> vector<16x256xbf16>
    %c0_10 = arith.constant 0 : index
    %c0_11 = arith.constant 0 : index
    %c0_12 = arith.constant 0 : index
    %13 = vector.load %arg5[%c0_10, %c0_11, %c0_12] : memref<3x256x128xbf16, #tpu.memory_space<vmem>>, vector<1x256x128xbf16>
    %14 = vector.shape_cast %13 : vector<1x256x128xbf16> to vector<256x128xbf16>
    %cst_13 = arith.constant dense<0.000000e+00> : vector<16x128xf32>
    %15 = tpu.matmul %12, %14, %cst_13 {dimension_numbers = #tpu.dot_dimension_numbers<[1], [0], [0], [1], [0, 0, 1, 1], [], []>} : vector<16x256xbf16>, vector<256x128xbf16>, vector<16x128xf32> -> vector<16x128xf32>
    %c0_14 = arith.constant 0 : index
    %c0_15 = arith.constant 0 : index
    %c0_16 = arith.constant 0 : index
    %16 = vector.load %arg6[%c0_14, %c0_15, %c0_16] : memref<3x1x128xf32, #tpu.memory_space<vmem>>, vector<1x1x128xf32>
    %17 = vector.shape_cast %16 : vector<1x1x128xf32> to vector<1x128xf32>
    %18 = vector.broadcast %17 : vector<1x128xf32> to vector<16x128xf32>
    %19 = arith.addf %15, %18 : vector<16x128xf32>
    %cst_17 = arith.constant 0.000000e+00 : f32
    %20 = vector.broadcast %cst_17 : f32 to vector<16x128xf32>
    %21 = arith.maximumf %19, %20 : vector<16x128xf32>
    %22 = arith.addf %8, %21 : vector<16x128xf32>
    %23 = arith.truncf %22 : vector<16x128xf32> to vector<16x128xbf16>
    %cst_18 = arith.constant dense<0.000000e+00> : vector<16x128xf32>
    %24 = tpu.matmul %1, %23, %cst_18 {dimension_numbers = #tpu.dot_dimension_numbers<[1], [0], [0], [1], [0, 0, 1, 1], [], []>} : vector<16x16xbf16>, vector<16x128xbf16>, vector<16x128xf32> -> vector<16x128xf32>
    %25 = arith.truncf %24 : vector<16x128xf32> to vector<16x128xbf16>
    %26 = tpu.concatenate %25, %23 in 1 : vector<16x128xbf16>, vector<16x128xbf16> -> vector<16x256xbf16>
    %c1 = arith.constant 1 : index
    %c0_19 = arith.constant 0 : index
    %c0_20 = arith.constant 0 : index
    %27 = vector.load %arg5[%c1, %c0_19, %c0_20] : memref<3x256x128xbf16, #tpu.memory_space<vmem>>, vector<1x256x128xbf16>
    %28 = vector.shape_cast %27 : vector<1x256x128xbf16> to vector<256x128xbf16>
    %cst_21 = arith.constant dense<0.000000e+00> : vector<16x128xf32>
    %29 = tpu.matmul %26, %28, %cst_21 {dimension_numbers = #tpu.dot_dimension_numbers<[1], [0], [0], [1], [0, 0, 1, 1], [], []>} : vector<16x256xbf16>, vector<256x128xbf16>, vector<16x128xf32> -> vector<16x128xf32>
    %c1_22 = arith.constant 1 : index
    %c0_23 = arith.constant 0 : index
    %c0_24 = arith.constant 0 : index
    %30 = vector.load %arg6[%c1_22, %c0_23, %c0_24] : memref<3x1x128xf32, #tpu.memory_space<vmem>>, vector<1x1x128xf32>
    %31 = vector.shape_cast %30 : vector<1x1x128xf32> to vector<1x128xf32>
    %32 = vector.broadcast %31 : vector<1x128xf32> to vector<16x128xf32>
    %33 = arith.addf %29, %32 : vector<16x128xf32>
    %cst_25 = arith.constant 0.000000e+00 : f32
    %34 = vector.broadcast %cst_25 : f32 to vector<16x128xf32>
    %35 = arith.maximumf %33, %34 : vector<16x128xf32>
    %36 = arith.addf %22, %35 : vector<16x128xf32>
    %37 = arith.truncf %36 : vector<16x128xf32> to vector<16x128xbf16>
    %cst_26 = arith.constant dense<0.000000e+00> : vector<16x128xf32>
    %38 = tpu.matmul %1, %37, %cst_26 {dimension_numbers = #tpu.dot_dimension_numbers<[1], [0], [0], [1], [0, 0, 1, 1], [], []>} : vector<16x16xbf16>, vector<16x128xbf16>, vector<16x128xf32> -> vector<16x128xf32>
    %39 = arith.truncf %38 : vector<16x128xf32> to vector<16x128xbf16>
    %40 = tpu.concatenate %39, %37 in 1 : vector<16x128xbf16>, vector<16x128xbf16> -> vector<16x256xbf16>
    %c2 = arith.constant 2 : index
    %c0_27 = arith.constant 0 : index
    %c0_28 = arith.constant 0 : index
    %41 = vector.load %arg5[%c2, %c0_27, %c0_28] : memref<3x256x128xbf16, #tpu.memory_space<vmem>>, vector<1x256x128xbf16>
    %42 = vector.shape_cast %41 : vector<1x256x128xbf16> to vector<256x128xbf16>
    %cst_29 = arith.constant dense<0.000000e+00> : vector<16x128xf32>
    %43 = tpu.matmul %40, %42, %cst_29 {dimension_numbers = #tpu.dot_dimension_numbers<[1], [0], [0], [1], [0, 0, 1, 1], [], []>} : vector<16x256xbf16>, vector<256x128xbf16>, vector<16x128xf32> -> vector<16x128xf32>
    %c2_30 = arith.constant 2 : index
    %c0_31 = arith.constant 0 : index
    %c0_32 = arith.constant 0 : index
    %44 = vector.load %arg6[%c2_30, %c0_31, %c0_32] : memref<3x1x128xf32, #tpu.memory_space<vmem>>, vector<1x1x128xf32>
    %45 = vector.shape_cast %44 : vector<1x1x128xf32> to vector<1x128xf32>
    %46 = vector.broadcast %45 : vector<1x128xf32> to vector<16x128xf32>
    %47 = arith.addf %43, %46 : vector<16x128xf32>
    %cst_33 = arith.constant 0.000000e+00 : f32
    %48 = vector.broadcast %cst_33 : f32 to vector<16x128xf32>
    %49 = arith.maximumf %47, %48 : vector<16x128xf32>
    %50 = arith.addf %36, %49 : vector<16x128xf32>
    %cst_34 = arith.constant dense<0.000000e+00> : vector<128xf32>
    %51 = vector.multi_reduction <add>, %50, %cst_34 [0] : vector<16x128xf32> to vector<128xf32>
    %52 = vector.shape_cast %51 : vector<128xf32> to vector<1x128xf32>
    %cst_35 = arith.constant 6.250000e-02 : f32
    %53 = vector.broadcast %cst_35 : f32 to vector<1x128xf32>
    %54 = arith.mulf %52, %53 : vector<1x128xf32>
    %55 = arith.truncf %54 : vector<1x128xf32> to vector<1x128xbf16>
    %c0_36 = arith.constant 0 : index
    %c0_37 = arith.constant 0 : index
    %56 = vector.load %arg7[%c0_36, %c0_37] : memref<128x128xbf16, #tpu.memory_space<vmem>>, vector<128x128xbf16>
    %cst_38 = arith.constant dense<0.000000e+00> : vector<1x128xf32>
    %57 = tpu.matmul %55, %56, %cst_38 {dimension_numbers = #tpu.dot_dimension_numbers<[1], [0], [0], [1], [0, 0, 1, 1], [], []>} : vector<1x128xbf16>, vector<128x128xbf16>, vector<1x128xf32> -> vector<1x128xf32>
    %c0_39 = arith.constant 0 : index
    %c0_40 = arith.constant 0 : index
    %58 = vector.load %arg8[%c0_39, %c0_40] : memref<1x128xf32, #tpu.memory_space<vmem>>, vector<1x128xf32>
    %59 = arith.addf %57, %58 : vector<1x128xf32>
    %c0_41 = arith.constant 0 : index
    %c0_42 = arith.constant 0 : index
    %c0_43 = arith.constant 0 : index
    %60 = vector.load %arg9[%c0_41, %c0_42, %c0_43] : memref<1x1x128xf32, #tpu.memory_space<vmem>>, vector<1x1x128xf32>
    %61 = vector.shape_cast %60 : vector<1x1x128xf32> to vector<1x128xf32>
    %62 = vector.shape_cast %59 : vector<1x128xf32> to vector<1x1x128xf32>
    tpu.vector_store %arg9[%c0_41, %c0_42, %c0_43], %62 {strides = array<i32>} : memref<1x1x128xf32, #tpu.memory_space<vmem>>, vector<1x1x128xf32>,
    return
  }
  func.func @transform_0(%arg0: i32) -> (i32, i32, i32) {
    %c0_i32 = arith.constant 0 : i32
    %c0_i32_0 = arith.constant 0 : i32
    %c0_i32_1 = arith.constant 0 : i32
    return %arg0, %c0_i32, %c0_i32_0 : i32, i32, i32
  }
  func.func @transform_1(%arg0: i32) -> (i32, i32, i32) {
    %c0_i32 = arith.constant 0 : i32
    %c0_i32_0 = arith.constant 0 : i32
    %c0_i32_1 = arith.constant 0 : i32
    return %arg0, %c0_i32, %c0_i32_0 : i32, i32, i32
  }
  func.func @transform_2(%arg0: i32) -> (i32, i32) {
    %c0_i32 = arith.constant 0 : i32
    %c0_i32_0 = arith.constant 0 : i32
    %c0_i32_1 = arith.constant 0 : i32
    return %c0_i32, %c0_i32_0 : i32, i32
  }
  func.func @transform_3(%arg0: i32) -> (i32, i32) {
    %c0_i32 = arith.constant 0 : i32
    %c0_i32_0 = arith.constant 0 : i32
    %c0_i32_1 = arith.constant 0 : i32
    return %c0_i32, %c0_i32_0 : i32, i32
  }
  func.func @transform_4(%arg0: i32) -> (i32, i32, i32) {
    %c0_i32 = arith.constant 0 : i32
    %c0_i32_0 = arith.constant 0 : i32
    %c0_i32_1 = arith.constant 0 : i32
    %c0_i32_2 = arith.constant 0 : i32
    return %c0_i32, %c0_i32_0, %c0_i32_1 : i32, i32, i32
  }
  func.func @transform_5(%arg0: i32) -> (i32, i32, i32) {
    %c0_i32 = arith.constant 0 : i32
    %c0_i32_0 = arith.constant 0 : i32
    %c0_i32_1 = arith.constant 0 : i32
    %c0_i32_2 = arith.constant 0 : i32
    return %c0_i32, %c0_i32_0, %c0_i32_1 : i32, i32, i32
  }
  func.func @transform_6(%arg0: i32) -> (i32, i32) {
    %c0_i32 = arith.constant 0 : i32
    %c0_i32_0 = arith.constant 0 : i32
    %c0_i32_1 = arith.constant 0 : i32
    return %c0_i32, %c0_i32_0 : i32, i32
  }
  func.func @transform_7(%arg0: i32) -> (i32, i32) {
    %c0_i32 = arith.constant 0 : i32
    %c0_i32_0 = arith.constant 0 : i32
    %c0_i32_1 = arith.constant 0 : i32
    return %c0_i32, %c0_i32_0 : i32, i32
  }
  func.func @transform_8(%arg0: i32) -> (i32, i32, i32) {
    %c0_i32 = arith.constant 0 : i32
    %c0_i32_0 = arith.constant 0 : i32
    %c0_i32_1 = arith.constant 0 : i32
    return %arg0, %c0_i32, %c0_i32_0 : i32, i32, i32
  }
}

</mosaic_0001>

<llo_original>
// kernel: model_train_forward.1
$region0: #{model_train_forward.1}
  #allocation0 [shape = 'u32[]', space=smem, size = 0x4, offset = 0x4, fixed_abs, tag = 'smem constant byte address 0x4 - core index']
  #allocation1 [shape = 'u32[144,128]{1,0:T(1,128)}', space=vmem, size = 0x12000, scoped, tag = 'internal scratch']
  %s0 = inlined_call_operand.vmem [shape: bf16[2,16,16], index: 0, kind: input, shape index: {}]
  %s1 = inlined_call_operand.vmem [shape: bf16[2,16,128], index: 1, kind: input, shape index: {}]
  %s2 = inlined_call_operand.vmem [shape: bf16[128,128], index: 2, kind: input, shape index: {}]
  %s3 = inlined_call_operand.vmem [shape: f32[1,128], index: 3, kind: input, shape index: {}]
  %s4 = inlined_call_operand.hbm [shape: bf16[3,256,128], index: 4, kind: input, shape index: {}]
  %s5 = inlined_call_operand.vmem [shape: f32[3,1,128], index: 5, kind: input, shape index: {}]
  %s6 = inlined_call_operand.vmem [shape: bf16[128,128], index: 6, kind: input, shape index: {}]
  %s7 = inlined_call_operand.vmem [shape: f32[1,128], index: 7, kind: input, shape index: {}]
  %s8 = inlined_call_operand.hbm [shape: f32[2,1,128], index: 8, kind: output, shape index: {}]
  %s9 = sld [smem:[#allocation0]]
  $region69: #{model_train_forward.1} parent=0
    _
  %s11 = ssub.s32 1, %s9
  %s12 = scalar_select 0, %s11, %s9
  $region1: #{model_train_forward.1} parent=0
    #allocation2 [shape = 'u8[196608]{0}', space=vmem, size = 0x30000, scoped, tag = 'input window, operand 4, single buffered']
    #allocation3 [shape = 's32[2]{0}', space=sflag, size = 0x8, scoped, tag = 'scoped memory for model_train_forward.1']
    #allocation4 [shape = 's32[2]{0}', space=sflag, size = 0x8, scoped, tag = 'scoped memory for model_train_forward.1']
    #allocation5 [shape = 'u8[1024]{0}', space=vmem, size = 0x400, scoped, tag = 'output window, operand 0']
    %13 = vsyncpa [#allocation3], 0
    %14 = vsyncpa [#allocation4], 0
    %s15 = scalar_lea.sflag [#allocation4], 1
    %16 = vsyncpa %s15, 0
    loop: start=0, step=1, limit=4
    $region2: #{model_train_forward.1} parent=1 // loop_pre_header
      _
    $region3: #{model_train_forward.1} parent=1 // loop_header
      %s18 = sphi 0, %s22
      %p19 = scmp.ge.s32.totalorder %s18, 4
      %s28 = sphi 0, %s30
      %s31 = sphi 0, %s28
      %s32 = sphi 0, %s31
      %s48 = sphi 0, %s32
      %s54 = sphi 0, %s56
      %s57 = sphi 0, %s54
      %s58 = sphi 0, %s57
      %s74 = sphi 0, %s58
      %s78 = sphi 0, %s78
      %s80 = sphi 0, %s78
      %s81 = sphi 0, %s80
      %s95 = sphi 0, %s81
      %s99 = sphi 0, %s99
      %s101 = sphi 0, %s99
      %s102 = sphi 0, %s101
      %s116 = sphi 0, %s102
      %s120 = sphi 0, %s120
      %s122 = sphi 0, %s120
      %s123 = sphi 0, %s122
      %s137 = sphi 0, %s123
      %s141 = sphi 0, %s141
      %s143 = sphi 0, %s141
      %s144 = sphi 0, %s143
      %s158 = sphi 0, %s144
      %s162 = sphi 0, %s162
      %s164 = sphi 0, %s162
      %s165 = sphi 0, %s164
      %s179 = sphi 0, %s165
      %s183 = sphi 0, %s183
      %s185 = sphi 0, %s183
      %s186 = sphi 0, %s185
      %s200 = sphi 0, %s186
      %s206 = sphi 0, %s208
      %s209 = sphi 0, %s206
      %s210 = sphi 0, %s209
      %s226 = sphi 0, %s210
    $region4: #{model_train_forward.1} parent=1 // loop_header_branch
      %21 = sbr.rel (%p19) target = $region8
    $region5: #{model_train_forward.1} parent=1 // loop_body
      %s23 = ssub.s32 %s18, 1
      %s24 = ssub.s32 %s18, 2
      %s25 = sadd.s32 %s18, 1
      %s26 = ssub.s32 %s18, %s25
      %p27 = scmp.eq.s32.totalorder %s26, 0
      %s29 = sadd.s32 %s28, 1
      %s30 = scalar_select %p27, %s28, %s29
      %p33 = pneg %p27
      %p34 = scmp.eq.s32.totalorder %s18, 1
      %p35 = por %p33, %p34
      %p36 = scmp.ne.s32.totalorder %s28, %s31
      %p37 = scmp.eq.s32.totalorder %s18, 0
      %p38 = por %p36, %p37
      %p39 = scmp.ne.s32.totalorder %s28, %s31
      %p40 = scmp.eq.s32.totalorder %s23, 1
      %p41 = por %p39, %p40
      %p42 = scmp.ne.s32.totalorder %s31, %s32
      %p43 = scmp.eq.s32.totalorder %s23, 0
      %p44 = por %p42, %p43
      %p45 = scmp.ne.s32.totalorder %s31, %s32
      %p46 = scmp.eq.s32.totalorder %s24, 1
      %p47 = por %p45, %p46
      %p49 = scmp.ne.s32.totalorder %s32, %s48
      %p50 = scmp.eq.s32.totalorder %s24, 0
      %p51 = por %p49, %p50
      %s52 = ssub.s32 %s18, %s25
      %p53 = scmp.eq.s32.totalorder %s52, 0
      %s55 = sadd.s32 %s54, 1
      %s56 = scalar_select %p53, %s54, %s55
      %p59 = pneg %p53
      %p60 = scmp.eq.s32.totalorder %s18, 1
      %p61 = por %p59, %p60
      %p62 = scmp.ne.s32.totalorder %s54, %s57
      %p63 = scmp.eq.s32.totalorder %s18, 0
      %p64 = por %p62, %p63
      %p65 = scmp.ne.s32.totalorder %s54, %s57
      %p66 = scmp.eq.s32.totalorder %s23, 1
      %p67 = por %p65, %p66
      %p68 = scmp.ne.s32.totalorder %s57, %s58
      %p69 = scmp.eq.s32.totalorder %s23, 0
      %p70 = por %p68, %p69
      %p71 = scmp.ne.s32.totalorder %s57, %s58
      %p72 = scmp.eq.s32.totalorder %s24, 1
      %p73 = por %p71, %p72
      %p75 = scmp.ne.s32.totalorder %s58, %s74
      %p76 = scmp.eq.s32.totalorder %s24, 0
      %p77 = por %p75, %p76
      %s79 = sadd.s32 %s78, 1
      %p82 = scmp.eq.s32.totalorder %s18, 1
      %p83 = scmp.ne.s32.totalorder %s78, %s80
      %p84 = scmp.eq.s32.totalorder %s18, 0
      %p85 = por %p83, %p84
      %p86 = scmp.ne.s32.totalorder %s78, %s80
      %p87 = scmp.eq.s32.totalorder %s23, 1
      %p88 = por %p86, %p87
      %p89 = scmp.ne.s32.totalorder %s80, %s81
      %p90 = scmp.eq.s32.totalorder %s23, 0
      %p91 = por %p89, %p90
      %p92 = scmp.ne.s32.totalorder %s80, %s81
      %p93 = scmp.eq.s32.totalorder %s24, 1
      %p94 = por %p92, %p93
      %p96 = scmp.ne.s32.totalorder %s81, %s95
      %p97 = scmp.eq.s32.totalorder %s24, 0
      %p98 = por %p96, %p97
      %s100 = sadd.s32 %s99, 1
      %p103 = scmp.eq.s32.totalorder %s18, 1
      %p104 = scmp.ne.s32.totalorder %s99, %s101
      %p105 = scmp.eq.s32.totalorder %s18, 0
      %p106 = por %p104, %p105
      %p107 = scmp.ne.s32.totalorder %s99, %s101
      %p108 = scmp.eq.s32.totalorder %s23, 1
      %p109 = por %p107, %p108
      %p110 = scmp.ne.s32.totalorder %s101, %s102
      %p111 = scmp.eq.s32.totalorder %s23, 0
      %p112 = por %p110, %p111
      %p113 = scmp.ne.s32.totalorder %s101, %s102
      %p114 = scmp.eq.s32.totalorder %s24, 1
      %p115 = por %p113, %p114
      %p117 = scmp.ne.s32.totalorder %s102, %s116
      %p118 = scmp.eq.s32.totalorder %s24, 0
      %p119 = por %p117, %p118
      %s121 = sadd.s32 %s120, 1
      %p124 = scmp.eq.s32.totalorder %s18, 1
      %p125 = scmp.ne.s32.totalorder %s120, %s122
      %p126 = scmp.eq.s32.totalorder %s18, 0
      %p127 = por %p125, %p126
      %p128 = scmp.ne.s32.totalorder %s120, %s122
      %p129 = scmp.eq.s32.totalorder %s23, 1
      %p130 = por %p128, %p129
      %p131 = scmp.ne.s32.totalorder %s122, %s123
      %p132 = scmp.eq.s32.totalorder %s23, 0
      %p133 = por %p131, %p132
      %p134 = scmp.ne.s32.totalorder %s122, %s123
      %p135 = scmp.eq.s32.totalorder %s24, 1
      %p136 = por %p134, %p135
      %p138 = scmp.ne.s32.totalorder %s123, %s137
      %p139 = scmp.eq.s32.totalorder %s24, 0
      %p140 = por %p138, %p139
      %s142 = sadd.s32 %s141, 1
      %p145 = scmp.eq.s32.totalorder %s18, 1
      %p146 = scmp.ne.s32.totalorder %s141, %s143
      %p147 = scmp.eq.s32.totalorder %s18, 0
      %p148 = por %p146, %p147
      %p149 = scmp.ne.s32.totalorder %s141, %s143
      %p150 = scmp.eq.s32.totalorder %s23, 1
      %p151 = por %p149, %p150
      %p152 = scmp.ne.s32.totalorder %s143, %s144
      %p153 = scmp.eq.s32.totalorder %s23, 0
      %p154 = por %p152, %p153
      %p155 = scmp.ne.s32.totalorder %s143, %s144
      %p156 = scmp.eq.s32.totalorder %s24, 1
      %p157 = por %p155, %p156
      %p159 = scmp.ne.s32.totalorder %s144, %s158
      %p160 = scmp.eq.s32.totalorder %s24, 0
      %p161 = por %p159, %p160
      %s163 = sadd.s32 %s162, 1
      %p166 = scmp.eq.s32.totalorder %s18, 1
      %p167 = scmp.ne.s32.totalorder %s162, %s164
      %p168 = scmp.eq.s32.totalorder %s18, 0
      %p169 = por %p167, %p168
      %p170 = scmp.ne.s32.totalorder %s162, %s164
      %p171 = scmp.eq.s32.totalorder %s23, 1
      %p172 = por %p170, %p171
      %p173 = scmp.ne.s32.totalorder %s164, %s165
      %p174 = scmp.eq.s32.totalorder %s23, 0
      %p175 = por %p173, %p174
      %p176 = scmp.ne.s32.totalorder %s164, %s165
      %p177 = scmp.eq.s32.totalorder %s24, 1
      %p178 = por %p176, %p177
      %p180 = scmp.ne.s32.totalorder %s165, %s179
      %p181 = scmp.eq.s32.totalorder %s24, 0
      %p182 = por %p180, %p181
      %s184 = sadd.s32 %s183, 1
      %p187 = scmp.eq.s32.totalorder %s18, 1
      %p188 = scmp.ne.s32.totalorder %s183, %s185
      %p189 = scmp.eq.s32.totalorder %s18, 0
      %p190 = por %p188, %p189
      %p191 = scmp.ne.s32.totalorder %s183, %s185
      %p192 = scmp.eq.s32.totalorder %s23, 1
      %p193 = por %p191, %p192
      %p194 = scmp.ne.s32.totalorder %s185, %s186
      %p195 = scmp.eq.s32.totalorder %s23, 0
      %p196 = por %p194, %p195
      %p197 = scmp.ne.s32.totalorder %s185, %s186
      %p198 = scmp.eq.s32.totalorder %s24, 1
      %p199 = por %p197, %p198
      %p201 = scmp.ne.s32.totalorder %s186, %s200
      %p202 = scmp.eq.s32.totalorder %s24, 0
      %p203 = por %p201, %p202
      %s204 = ssub.s32 %s18, %s25
      %p205 = scmp.eq.s32.totalorder %s204, 0
      %s207 = sadd.s32 %s206, 1
      %s208 = scalar_select %p205, %s206, %s207
      %p211 = pneg %p205
      %p212 = scmp.eq.s32.totalorder %s18, 1
      %p213 = por %p211, %p212
      %p214 = scmp.ne.s32.totalorder %s206, %s209
      %p215 = scmp.eq.s32.totalorder %s18, 0
      %p216 = por %p214, %p215
      %p217 = scmp.ne.s32.totalorder %s206, %s209
      %p218 = scmp.eq.s32.totalorder %s23, 1
      %p219 = por %p217, %p218
      %p220 = scmp.ne.s32.totalorder %s209, %s210
      %p221 = scmp.eq.s32.totalorder %s23, 0
      %p222 = por %p220, %p221
      %p223 = scmp.ne.s32.totalorder %s209, %s210
      %p224 = scmp.eq.s32.totalorder %s24, 1
      %p225 = por %p223, %p224
      %p227 = scmp.ne.s32.totalorder %s210, %s226
      %p228 = scmp.eq.s32.totalorder %s24, 0
      %p229 = por %p227, %p228
      %p230 = scmp.le.s32.totalorder 1, %s18
      %p231 = scmp.lt.s32.totalorder %s18, 3
      %p232 = pnand %p230, %p231
      %p233 = pneg %p232
      // Predicated region
      $region9: #{model_train_forward.1} parent=5 // pred_check
        _
      $region10: #{model_train_forward.1} parent=5 // pred_check_branch
        %235 = sbr.rel (%p232) target = $region12
      $region11: #{model_train_forward.1} parent=5 // pred_region
        %s236 = ssub.s32 %s18, 1
        // Predicated region
        $region13: #{model_train_forward.1} parent=11 // pred_check
          %p237 = pneg %p91
        $region14: #{model_train_forward.1} parent=11 // pred_check_branch
          %239 = sbr.rel (%p237) target = $region16
        $region15: #{model_train_forward.1} parent=11 // pred_region
          _
        $region16: #{model_train_forward.1} parent=11 // pred_fallthru
          _
        // Predicated region
        $region17: #{model_train_forward.1} parent=11 // pred_check
          %p240 = pneg %p112
        $region18: #{model_train_forward.1} parent=11 // pred_check_branch
          %242 = sbr.rel (%p240) target = $region20
        $region19: #{model_train_forward.1} parent=11 // pred_region
          _
        $region20: #{model_train_forward.1} parent=11 // pred_fallthru
          _
        // Predicated region
        $region21: #{model_train_forward.1} parent=11 // pred_check
          %p243 = pneg %p133
        $region22: #{model_train_forward.1} parent=11 // pred_check_branch
          %245 = sbr.rel (%p243) target = $region24
        $region23: #{model_train_forward.1} parent=11 // pred_region
          %s247 = ssub.s32 6144, 6144
          %248 = vsyncadd [#allocation3], %s247
          %s249 = sshll.u32 [#allocation2], 4
          %s250 = int_to_ptr.vmem [resolvable:$true] %s249
          %255 = dma.hbm_to_vmem [thread:$0]  %s4, 6144, %s250, [#allocation3], 64, 64, 4
        $region24: #{model_train_forward.1} parent=11 // pred_fallthru
          _
        // Predicated region
        $region25: #{model_train_forward.1} parent=11 // pred_check
          %p256 = pneg %p154
        $region26: #{model_train_forward.1} parent=11 // pred_check_branch
          %258 = sbr.rel (%p256) target = $region28
        $region27: #{model_train_forward.1} parent=11 // pred_region
          _
        $region28: #{model_train_forward.1} parent=11 // pred_fallthru
          _
        // Predicated region
        $region29: #{model_train_forward.1} parent=11 // pred_check
          %p259 = pneg %p175
        $region30: #{model_train_forward.1} parent=11 // pred_check_branch
          %261 = sbr.rel (%p259) target = $region32
        $region31: #{model_train_forward.1} parent=11 // pred_region
          _
        $region32: #{model_train_forward.1} parent=11 // pred_fallthru
          _
        // Predicated region
        $region33: #{model_train_forward.1} parent=11 // pred_check
          %p262 = pneg %p196
        $region34: #{model_train_forward.1} parent=11 // pred_check_branch
          %264 = sbr.rel (%p262) target = $region36
        $region35: #{model_train_forward.1} parent=11 // pred_region
          _
        $region36: #{model_train_forward.1} parent=11 // pred_fallthru
          _
      $region12: #{model_train_forward.1} parent=5 // pred_fallthru
        _
      %p265 = scmp.lt.s32.totalorder %s18, 2
      // Predicated region
      $region37: #{model_train_forward.1} parent=5 // pred_check
        %p266 = pneg %p265
      $region38: #{model_train_forward.1} parent=5 // pred_check_branch
        %268 = sbr.rel (%p266) target = $region40
      $region39: #{model_train_forward.1} parent=5 // pred_region
        // Predicated region
        $region41: #{model_train_forward.1} parent=39 // pred_check
          %p269 = pneg %p38
        $region42: #{model_train_forward.1} parent=39 // pred_check_branch
          %271 = sbr.rel (%p269) target = $region44
        $region43: #{model_train_forward.1} parent=39 // pred_region
          %p272 = scmp.lt.s32.totalorder %s18, 1
          %s273 = scalar_select %p272, %s18, 1
          %s274 = smul.addr %s273, 2
          %s275 = smul.addr %s274, 4
          %s276 = scalar_lea.vmem %s0, %s275
        $region44: #{model_train_forward.1} parent=39 // pred_fallthru
          _
        // Predicated region
        $region45: #{model_train_forward.1} parent=39 // pred_check
          %p277 = pneg %p64
        $region46: #{model_train_forward.1} parent=39 // pred_check_branch
          %279 = sbr.rel (%p277) target = $region48
        $region47: #{model_train_forward.1} parent=39 // pred_region
          %p280 = scmp.lt.s32.totalorder %s18, 1
          %s281 = scalar_select %p280, %s18, 1
          %s282 = smul.addr %s281, 2
          %s283 = smul.addr %s282, 4
          %s284 = scalar_lea.vmem %s1, %s283
        $region48: #{model_train_forward.1} parent=39 // pred_fallthru
          _
      $region40: #{model_train_forward.1} parent=5 // pred_fallthru
        _
      %p285 = scmp.le.s32.totalorder 1, %s18
      %p286 = scmp.lt.s32.totalorder %s18, 3
      %p287 = pnand %p285, %p286
      %p288 = pneg %p287
      // Predicated region
      $region49: #{model_train_forward.1} parent=5 // pred_check
        _
      $region50: #{model_train_forward.1} parent=5 // pred_check_branch
        %290 = sbr.rel (%p287) target = $region52
      $region51: #{model_train_forward.1} parent=5 // pred_region
        %s291 = ssub.s32 %s18, 1
        // Predicated region
        $region53: #{model_train_forward.1} parent=51 // pred_check
          %p292 = pneg %p133
        $region54: #{model_train_forward.1} parent=51 // pred_check_branch
          %294 = sbr.rel (%p292) target = $region56
        $region55: #{model_train_forward.1} parent=51 // pred_region
          %295 = dma.done [#allocation3], 6144
        $region56: #{model_train_forward.1} parent=51 // pred_fallthru
          _
        %p296 = scmp.lt.s32.totalorder %s23, 1
        %s297 = scalar_select %p296, %s23, 1
        %s298 = smul.addr %s297, 2
        %s299 = smul.addr %s298, 4
        %s300 = scalar_lea.vmem %s0, %s299
        %p301 = pneg %p44
        %p302 = pneg %p41
        %p303 = scmp.lt.s32.totalorder %s23, 1
        %s304 = scalar_select %p303, %s23, 1
        %s305 = smul.addr %s304, 2
        %s306 = smul.addr %s305, 4
        %s307 = scalar_lea.vmem %s1, %s306
        %p308 = pneg %p70
        %p309 = pneg %p67
        %p310 = pneg %p91
        %p311 = pneg %p88
        %p312 = pneg %p112
        %p313 = pneg %p109
        %p314 = pneg %p133
        %p315 = pneg %p130
        %p316 = pneg %p154
        %p317 = pneg %p151
        %p318 = pneg %p175
        %p319 = pneg %p172
        %p320 = pneg %p196
        %p321 = pneg %p193
        %p322 = pneg %p222
        %p323 = pneg %p219
        %s324 = sand.u32 %s209, 1
        %s325 = scalar_lea.sflag [#allocation4], %s324
        %s326 = sand.u32 %s209, 1
        %s327 = scalar_lea.vmem [#allocation5], %s326
        %p328 = scmp.lt.s32.totalorder %s23, 1
        %s329 = scalar_select %p328, %s23, 1
        %s330 = smul.addr %s329, 2
        %s331 = smul.addr %s330, 4
        %s332 = scalar_lea.vmem %s0, %s331
        %p333 = scmp.lt.s32.totalorder %s23, 1
        %s334 = scalar_select %p333, %s23, 1
        %s335 = smul.addr %s334, 2
        %s336 = smul.addr %s335, 4
        %s337 = scalar_lea.vmem %s1, %s336
        %v339 = vld [vmem:[%s332] sm:$0xf]
        %v340 = vld [vmem:[%s332 + $0x4] sm:$0xf]
        %v341 = vld [vmem:[%s337] sm:$0xf]
        %v342 = vld [vmem:[%s337 + $0x4] sm:$0xf]
        %v343 = vld [vmem:[%s2] sm:$0xf]
        %v344 = vld [vmem:[%s2 + $0x4] sm:$0xf]
        %v345 = vld [vmem:[%s2 + $0x8] sm:$0xf]
        %v346 = vld [vmem:[%s2 + $0xc] sm:$0xf]
        %v347 = vld [vmem:[%s2 + $0x10] sm:$0xf]
        %v348 = vld [vmem:[%s2 + $0x14] sm:$0xf]
        %v349 = vld [vmem:[%s2 + $0x18] sm:$0xf]
        %v350 = vld [vmem:[%s2 + $0x1c] sm:$0xf]
        %v351 = vld [vmem:[%s2 + $0x20] sm:$0xf]
        %v352 = vld [vmem:[%s2 + $0x24] sm:$0xf]
        %v353 = vld [vmem:[%s2 + $0x28] sm:$0xf]
        %v354 = vld [vmem:[%s2 + $0x2c] sm:$0xf]
        %v355 = vld [vmem:[%s2 + $0x30] sm:$0xf]
        %v356 = vld [vmem:[%s2 + $0x34] sm:$0xf]
        %v357 = vld [vmem:[%s2 + $0x38] sm:$0xf]
        %v358 = vld [vmem:[%s2 + $0x3c] sm:$0xf]
        %v359 = vld [vmem:[%s3] sm:$0x1]
        %v361 = vlaneseq
        %v362 = vshrl.u32 %v361, 7
        %v363 = vsub.s32 0, %v362
        %v364 = vrot.slane %v359, %v363
        %v368 = vunpack.c.l.b16 %v341
        %v369 = vunpack.c.l.b16 %v342
        %v370 = vpack.c.b16 %v369, %v368
        %v388 = vunpack.c.l.b16 %v343
        %v389 = vunpack.c.l.b16 %v344
        %v390 = vunpack.c.l.b16 %v345
        %v391 = vunpack.c.l.b16 %v346
        %v392 = vunpack.c.l.b16 %v347
        %v393 = vunpack.c.l.b16 %v348
        %v394 = vunpack.c.l.b16 %v349
        %v395 = vunpack.c.l.b16 %v350
        %v396 = vunpack.c.l.b16 %v351
        %v397 = vunpack.c.l.b16 %v352
        %v398 = vunpack.c.l.b16 %v353
        %v399 = vunpack.c.l.b16 %v354
        %v400 = vunpack.c.l.b16 %v355
        %v401 = vunpack.c.l.b16 %v356
        %v402 = vunpack.c.l.b16 %v357
        %v403 = vunpack.c.l.b16 %v358
        %v404 = vpack.c.b16 %v389, %v388
        %v405 = vpack.c.b16 %v391, %v390
        %v406 = vpack.c.b16 %v393, %v392
        %v407 = vpack.c.b16 %v395, %v394
        %v408 = vpack.c.b16 %v397, %v396
        %v409 = vpack.c.b16 %v399, %v398
        %v410 = vpack.c.b16 %v401, %v400
        %v411 = vpack.c.b16 %v403, %v402
        %420 = vmatprep.subr.bf16.mxu0 0
        %421 = vmatpush1.bf16.msra.mxu0 %v404
        %422 = vmatprep.subr.bf16.mxu0 0
        %423 = vmatpush1.bf16.msra.mxu0 %v405
        %424 = vmatprep.subr.bf16.mxu0 0
        %425 = vmatpush1.bf16.msra.mxu0 %v406
        %426 = vmatprep.subr.bf16.mxu0 0
        %427 = vmatpush1.bf16.msra.mxu0 %v407
        %428 = vmatprep.subr.bf16.mxu0 0
        %429 = vmatpush1.bf16.msra.mxu0 %v408
        %430 = vmatprep.subr.bf16.mxu0 0
        %431 = vmatpush1.bf16.msra.mxu0 %v409
        %432 = vmatprep.subr.bf16.mxu0 0
        %433 = vmatpush1.bf16.msra.mxu0 %v410
        %434 = vmatprep.subr.bf16.mxu0 0
        %435 = vmatpush1.bf16.msra.mxu0 %v411
        %436 = vmatprep.subr.bf16.mxu0 0
        %437 = vmatpush1.bf16.msra.mxu0 0
        %438 = vmatprep.subr.bf16.mxu0 0
        %439 = vmatpush1.bf16.msra.mxu0 0
        %440 = vmatprep.subr.bf16.mxu0 0
        %441 = vmatpush1.bf16.msra.mxu0 0
        %442 = vmatprep.subr.bf16.mxu0 0
        %443 = vmatpush1.bf16.msra.mxu0 0
        %444 = vmatprep.subr.bf16.mxu0 0
        %445 = vmatpush1.bf16.msra.mxu0 0
        %446 = vmatprep.subr.bf16.mxu0 0
        %447 = vmatpush1.bf16.msra.mxu0 0
        %448 = vmatprep.subr.bf16.mxu0 0
        %449 = vmatpush1.bf16.msra.mxu0 0
        %450 = vmatprep.subr.bf16.mxu0 0
        %451 = vmatpush1.bf16.msra.mxu0 0
        %452 = vmatprep.mubr.bf16.mxu0 0
        %453 = vmatmul.mubr.bf16.gmra.mrb[0].mxu0 %v370
        %v454 = vpop.f32.mrb[0].mxu0
        %v455 = vadd.f32 %v364, %v454
        %v456 = vpop.f32.mrb[0].mxu0
        %v457 = vpop.f32.mrb[0].mxu0
        %v458 = vadd.f32 %v364, %v457
        %v459 = vpop.f32.mrb[0].mxu0
        %460 = vdwg.mxu0
        %v461 = vpack.c.bf16 %v458, %v455
        %v464 = vunpack.c.l.b16 %v339
        %v465 = vunpack.c.l.b16 %v340
        %v466 = vpack.c.b16 %v465, %v464
        %vm467 = vcmask 130048
        %v469 = vsel %vm467, %v466, 0
        %471 = vmatprep.subr.bf16.mxu0 0
        %472 = vmatpush1.bf16.msra.mxu0 %v461
        %473 = vmatprep.subr.bf16.mxu0 0
        %474 = vmatpush1.bf16.msra.mxu0 0
        %475 = vmatprep.subr.bf16.mxu0 0
        %476 = vmatpush1.bf16.msra.mxu0 0
        %477 = vmatprep.subr.bf16.mxu0 0
        %478 = vmatpush1.bf16.msra.mxu0 0
        %479 = vmatprep.subr.bf16.mxu0 0
        %480 = vmatpush1.bf16.msra.mxu0 0
        %481 = vmatprep.subr.bf16.mxu0 0
        %482 = vmatpush1.bf16.msra.mxu0 0
        %483 = vmatprep.subr.bf16.mxu0 0
        %484 = vmatpush1.bf16.msra.mxu0 0
        %485 = vmatprep.subr.bf16.mxu0 0
        %486 = vmatpush1.bf16.msra.mxu0 0
        %487 = vmatprep.subr.bf16.mxu0 0
        %488 = vmatpush1.bf16.msra.mxu0 0
        %489 = vmatprep.subr.bf16.mxu0 0
        %490 = vmatpush1.bf16.msra.mxu0 0
        %491 = vmatprep.subr.bf16.mxu0 0
        %492 = vmatpush1.bf16.msra.mxu0 0
        %493 = vmatprep.subr.bf16.mxu0 0
        %494 = vmatpush1.bf16.msra.mxu0 0
        %495 = vmatprep.subr.bf16.mxu0 0
        %496 = vmatpush1.bf16.msra.mxu0 0
        %497 = vmatprep.subr.bf16.mxu0 0
        %498 = vmatpush1.bf16.msra.mxu0 0
        %499 = vmatprep.subr.bf16.mxu0 0
        %500 = vmatpush1.bf16.msra.mxu0 0
        %501 = vmatprep.subr.bf16.mxu0 0
        %502 = vmatpush1.bf16.msra.mxu0 0
        %503 = vmatprep.mubr.bf16.mxu0 0
        %504 = vmatmul.mubr.bf16.gmra.mrb[0].mxu0 %v469
        %v505 = vpop.f32.mrb[0].mxu0
        %v506 = vadd.f32 0.0, %v505
        %v507 = vpop.f32.mrb[0].mxu0
        %v508 = vpop.f32.mrb[0].mxu0
        %v509 = vadd.f32 0.0, %v508
        %v510 = vpop.f32.mrb[0].mxu0
        %511 = vdwg.mxu0
        %v512 = vpack.c.bf16 %v509, %v506
        %v513 = vld [vmem:[#allocation2] sm:$0xf]
        %v514 = vld [vmem:[#allocation2 + $0x4] sm:$0xf]
        %v515 = vld [vmem:[#allocation2 + $0x8] sm:$0xf]
        %v516 = vld [vmem:[#allocation2 + $0xc] sm:$0xf]
        %v517 = vld [vmem:[#allocation2 + $0x10] sm:$0xf]
        %v518 = vld [vmem:[#allocation2 + $0x14] sm:$0xf]
        %v519 = vld [vmem:[#allocation2 + $0x18] sm:$0xf]
        %v520 = vld [vmem:[#allocation2 + $0x1c] sm:$0xf]
        %v521 = vld [vmem:[#allocation2 + $0x20] sm:$0xf]
        %v522 = vld [vmem:[#allocation2 + $0x24] sm:$0xf]
        %v523 = vld [vmem:[#allocation2 + $0x28] sm:$0xf]
        %v524 = vld [vmem:[#allocation2 + $0x2c] sm:$0xf]
        %v525 = vld [vmem:[#allocation2 + $0x30] sm:$0xf]
        %v526 = vld [vmem:[#allocation2 + $0x34] sm:$0xf]
        %v527 = vld [vmem:[#allocation2 + $0x38] sm:$0xf]
        %v528 = vld [vmem:[#allocation2 + $0x3c] sm:$0xf]
        %v529 = vld [vmem:[#allocation2 + $0x40] sm:$0xf]
        %v530 = vld [vmem:[#allocation2 + $0x44] sm:$0xf]
        %v531 = vld [vmem:[#allocation2 + $0x48] sm:$0xf]
        %v532 = vld [vmem:[#allocation2 + $0x4c] sm:$0xf]
        %v533 = vld [vmem:[#allocation2 + $0x50] sm:$0xf]
        %v534 = vld [vmem:[#allocation2 + $0x54] sm:$0xf]
        %v535 = vld [vmem:[#allocation2 + $0x58] sm:$0xf]
        %v536 = vld [vmem:[#allocation2 + $0x5c] sm:$0xf]
        %v537 = vld [vmem:[#allocation2 + $0x60] sm:$0xf]
        %v538 = vld [vmem:[#allocation2 + $0x64] sm:$0xf]
        %v539 = vld [vmem:[#allocation2 + $0x68] sm:$0xf]
        %v540 = vld [vmem:[#allocation2 + $0x6c] sm:$0xf]
        %v541 = vld [vmem:[#allocation2 + $0x70] sm:$0xf]
        %v542 = vld [vmem:[#allocation2 + $0x74] sm:$0xf]
        %v543 = vld [vmem:[#allocation2 + $0x78] sm:$0xf]
        %v544 = vld [vmem:[#allocation2 + $0x7c] sm:$0xf]
        %v545 = vld [vmem:[%s5] sm:$0x1]
        %v547 = vlaneseq
        %v548 = vshrl.u32 %v547, 7
        %v549 = vsub.s32 0, %v548
        %v550 = vrot.slane %v545, %v549
        %v584 = vunpack.c.l.b16 %v513
        %v585 = vunpack.c.l.b16 %v514
        %v586 = vunpack.c.l.b16 %v515
        %v587 = vunpack.c.l.b16 %v516
        %v588 = vunpack.c.l.b16 %v517
        %v589 = vunpack.c.l.b16 %v518
        %v590 = vunpack.c.l.b16 %v519
        %v591 = vunpack.c.l.b16 %v520
        %v592 = vunpack.c.l.b16 %v521
        %v593 = vunpack.c.l.b16 %v522
        %v594 = vunpack.c.l.b16 %v523
        %v595 = vunpack.c.l.b16 %v524
        %v596 = vunpack.c.l.b16 %v525
        %v597 = vunpack.c.l.b16 %v526
        %v598 = vunpack.c.l.b16 %v527
        %v599 = vunpack.c.l.b16 %v528
        %v600 = vunpack.c.l.b16 %v529
        %v601 = vunpack.c.l.b16 %v530
        %v602 = vunpack.c.l.b16 %v531
        %v603 = vunpack.c.l.b16 %v532
        %v604 = vunpack.c.l.b16 %v533
        %v605 = vunpack.c.l.b16 %v534
        %v606 = vunpack.c.l.b16 %v535
        %v607 = vunpack.c.l.b16 %v536
        %v608 = vunpack.c.l.b16 %v537
        %v609 = vunpack.c.l.b16 %v538
        %v610 = vunpack.c.l.b16 %v539
        %v611 = vunpack.c.l.b16 %v540
        %v612 = vunpack.c.l.b16 %v541
        %v613 = vunpack.c.l.b16 %v542
        %v614 = vunpack.c.l.b16 %v543
        %v615 = vunpack.c.l.b16 %v544
        %v616 = vpack.c.b16 %v585, %v584
        %v617 = vpack.c.b16 %v587, %v586
        %v618 = vpack.c.b16 %v589, %v588
        %v619 = vpack.c.b16 %v591, %v590
        %v620 = vpack.c.b16 %v593, %v592
        %v621 = vpack.c.b16 %v595, %v594
        %v622 = vpack.c.b16 %v597, %v596
        %v623 = vpack.c.b16 %v599, %v598
        %v624 = vpack.c.b16 %v601, %v600
        %v625 = vpack.c.b16 %v603, %v602
        %v626 = vpack.c.b16 %v605, %v604
        %v627 = vpack.c.b16 %v607, %v606
        %v628 = vpack.c.b16 %v609, %v608
        %v629 = vpack.c.b16 %v611, %v610
        %v630 = vpack.c.b16 %v613, %v612
        %v631 = vpack.c.b16 %v615, %v614
        %648 = vmatprep.subr.bf16.mxu0 0
        %649 = vmatpush1.bf16.msra.mxu0 %v616
        %650 = vmatprep.subr.bf16.mxu0 0
        %651 = vmatpush1.bf16.msra.mxu0 %v617
        %652 = vmatprep.subr.bf16.mxu0 0
        %653 = vmatpush1.bf16.msra.mxu0 %v618
        %654 = vmatprep.subr.bf16.mxu0 0
        %655 = vmatpush1.bf16.msra.mxu0 %v619
        %656 = vmatprep.subr.bf16.mxu0 0
        %657 = vmatpush1.bf16.msra.mxu0 %v620
        %658 = vmatprep.subr.bf16.mxu0 0
        %659 = vmatpush1.bf16.msra.mxu0 %v621
        %660 = vmatprep.subr.bf16.mxu0 0
        %661 = vmatpush1.bf16.msra.mxu0 %v622
        %662 = vmatprep.subr.bf16.mxu0 0
        %663 = vmatpush1.bf16.msra.mxu0 %v623
        %664 = vmatprep.subr.bf16.mxu0 0
        %665 = vmatpush1.bf16.msra.mxu0 %v624
        %666 = vmatprep.subr.bf16.mxu0 0
        %667 = vmatpush1.bf16.msra.mxu0 %v625
        %668 = vmatprep.subr.bf16.mxu0 0
        %669 = vmatpush1.bf16.msra.mxu0 %v626
        %670 = vmatprep.subr.bf16.mxu0 0
        %671 = vmatpush1.bf16.msra.mxu0 %v627
        %672 = vmatprep.subr.bf16.mxu0 0
        %673 = vmatpush1.bf16.msra.mxu0 %v628
        %674 = vmatprep.subr.bf16.mxu0 0
        %675 = vmatpush1.bf16.msra.mxu0 %v629
        %676 = vmatprep.subr.bf16.mxu0 0
        %677 = vmatpush1.bf16.msra.mxu0 %v630
        %678 = vmatprep.subr.bf16.mxu0 0
        %679 = vmatpush1.bf16.msra.mxu0 %v631
        %680 = vmatprep.mubr.bf16.mxu0 %v461
        %681 = vmatmul.mubr.bf16.gmra.mrb[0].mxu0 %v512
        %v682 = vpop.f32.mrb[0].mxu0
        %v683 = vadd.f32 %v550, %v682
        %v684 = vpop.f32.mrb[0].mxu0
        %v685 = vpop.f32.mrb[0].mxu0
        %v686 = vadd.f32 %v550, %v685
        %v687 = vpop.f32.mrb[0].mxu0
        %688 = vdwg.mxu0
        %v689 = vmax.f32 %v683, 0.0
        %v690 = vmax.f32 %v686, 0.0
        %v691 = vadd.f32 %v455, %v689
        %v692 = vadd.f32 %v458, %v690
        %v693 = vpack.c.bf16 %v692, %v691
        %694 = vmatprep.subr.bf16.mxu0 0
        %695 = vmatpush1.bf16.msra.mxu0 %v693
        %696 = vmatprep.subr.bf16.mxu0 0
        %697 = vmatpush1.bf16.msra.mxu0 0
        %698 = vmatprep.subr.bf16.mxu0 0
        %699 = vmatpush1.bf16.msra.mxu0 0
        %700 = vmatprep.subr.bf16.mxu0 0
        %701 = vmatpush1.bf16.msra.mxu0 0
        %702 = vmatprep.subr.bf16.mxu0 0
        %703 = vmatpush1.bf16.msra.mxu0 0
        %704 = vmatprep.subr.bf16.mxu0 0
        %705 = vmatpush1.bf16.msra.mxu0 0
        %706 = vmatprep.subr.bf16.mxu0 0
        %707 = vmatpush1.bf16.msra.mxu0 0
        %708 = vmatprep.subr.bf16.mxu0 0
        %709 = vmatpush1.bf16.msra.mxu0 0
        %710 = vmatprep.subr.bf16.mxu0 0
        %711 = vmatpush1.bf16.msra.mxu0 0
        %712 = vmatprep.subr.bf16.mxu0 0
        %713 = vmatpush1.bf16.msra.mxu0 0
        %714 = vmatprep.subr.bf16.mxu0 0
        %715 = vmatpush1.bf16.msra.mxu0 0
        %716 = vmatprep.subr.bf16.mxu0 0
        %717 = vmatpush1.bf16.msra.mxu0 0
        %718 = vmatprep.subr.bf16.mxu0 0
        %719 = vmatpush1.bf16.msra.mxu0 0
        %720 = vmatprep.subr.bf16.mxu0 0
        %721 = vmatpush1.bf16.msra.mxu0 0
        %722 = vmatprep.subr.bf16.mxu0 0
        %723 = vmatpush1.bf16.msra.mxu0 0
        %724 = vmatprep.subr.bf16.mxu0 0
        %725 = vmatpush1.bf16.msra.mxu0 0
        %726 = vmatprep.mubr.bf16.mxu0 0
        %727 = vmatmul.mubr.bf16.gmra.mrb[0].mxu0 %v469
        %v728 = vpop.f32.mrb[0].mxu0
        %v729 = vadd.f32 0.0, %v728
        %v730 = vpop.f32.mrb[0].mxu0
        %v731 = vpop.f32.mrb[0].mxu0
        %v732 = vadd.f32 0.0, %v731
        %v733 = vpop.f32.mrb[0].mxu0
        %734 = vdwg.mxu0
        %v735 = vpack.c.bf16 %v732, %v729
        %s736 = scalar_lea.vmem [#allocation2], 128
        %v737 = vld [vmem:[%s736] sm:$0xf]
        %v738 = vld [vmem:[%s736 + $0x4] sm:$0xf]
        %v739 = vld [vmem:[%s736 + $0x8] sm:$0xf]
        %v740 = vld [vmem:[%s736 + $0xc] sm:$0xf]
        %v741 = vld [vmem:[%s736 + $0x10] sm:$0xf]
        %v742 = vld [vmem:[%s736 + $0x14] sm:$0xf]
        %v743 = vld [vmem:[%s736 + $0x18] sm:$0xf]
        %v744 = vld [vmem:[%s736 + $0x1c] sm:$0xf]
        %v745 = vld [vmem:[%s736 + $0x20] sm:$0xf]
        %v746 = vld [vmem:[%s736 + $0x24] sm:$0xf]
        %v747 = vld [vmem:[%s736 + $0x28] sm:$0xf]
        %v748 = vld [vmem:[%s736 + $0x2c] sm:$0xf]
        %v749 = vld [vmem:[%s736 + $0x30] sm:$0xf]
        %v750 = vld [vmem:[%s736 + $0x34] sm:$0xf]
        %v751 = vld [vmem:[%s736 + $0x38] sm:$0xf]
        %v752 = vld [vmem:[%s736 + $0x3c] sm:$0xf]
        %v753 = vld [vmem:[%s736 + $0x40] sm:$0xf]
        %v754 = vld [vmem:[%s736 + $0x44] sm:$0xf]
        %v755 = vld [vmem:[%s736 + $0x48] sm:$0xf]
        %v756 = vld [vmem:[%s736 + $0x4c] sm:$0xf]
        %v757 = vld [vmem:[%s736 + $0x50] sm:$0xf]
        %v758 = vld [vmem:[%s736 + $0x54] sm:$0xf]
        %v759 = vld [vmem:[%s736 + $0x58] sm:$0xf]
        %v760 = vld [vmem:[%s736 + $0x5c] sm:$0xf]
        %v761 = vld [vmem:[%s736 + $0x60] sm:$0xf]
        %v762 = vld [vmem:[%s736 + $0x64] sm:$0xf]
        %v763 = vld [vmem:[%s736 + $0x68] sm:$0xf]
        %v764 = vld [vmem:[%s736 + $0x6c] sm:$0xf]
        %v765 = vld [vmem:[%s736 + $0x70] sm:$0xf]
        %v766 = vld [vmem:[%s736 + $0x74] sm:$0xf]
        %v767 = vld [vmem:[%s736 + $0x78] sm:$0xf]
        %v768 = vld [vmem:[%s736 + $0x7c] sm:$0xf]
        %s769 = scalar_lea.vmem %s5, 1
        %v770 = vld [vmem:[%s769] sm:$0x1]
        %v772 = vlaneseq
        %v773 = vshrl.u32 %v772, 7
        %v774 = vsub.s32 0, %v773
        %v775 = vrot.slane %v770, %v774
        %v809 = vunpack.c.l.b16 %v737
        %v810 = vunpack.c.l.b16 %v738
        %v811 = vunpack.c.l.b16 %v739
        %v812 = vunpack.c.l.b16 %v740
        %v813 = vunpack.c.l.b16 %v741
        %v814 = vunpack.c.l.b16 %v742
        %v815 = vunpack.c.l.b16 %v743
        %v816 = vunpack.c.l.b16 %v744
        %v817 = vunpack.c.l.b16 %v745
        %v818 = vunpack.c.l.b16 %v746
        %v819 = vunpack.c.l.b16 %v747
        %v820 = vunpack.c.l.b16 %v748
        %v821 = vunpack.c.l.b16 %v749
        %v822 = vunpack.c.l.b16 %v750
        %v823 = vunpack.c.l.b16 %v751
        %v824 = vunpack.c.l.b16 %v752
        %v825 = vunpack.c.l.b16 %v753
        %v826 = vunpack.c.l.b16 %v754
        %v827 = vunpack.c.l.b16 %v755
        %v828 = vunpack.c.l.b16 %v756
        %v829 = vunpack.c.l.b16 %v757
        %v830 = vunpack.c.l.b16 %v758
        %v831 = vunpack.c.l.b16 %v759
        %v832 = vunpack.c.l.b16 %v760
        %v833 = vunpack.c.l.b16 %v761
        %v834 = vunpack.c.l.b16 %v762
        %v835 = vunpack.c.l.b16 %v763
        %v836 = vunpack.c.l.b16 %v764
        %v837 = vunpack.c.l.b16 %v765
        %v838 = vunpack.c.l.b16 %v766
        %v839 = vunpack.c.l.b16 %v767
        %v840 = vunpack.c.l.b16 %v768
        %v841 = vpack.c.b16 %v810, %v809
        %v842 = vpack.c.b16 %v812, %v811
        %v843 = vpack.c.b16 %v814, %v813
        %v844 = vpack.c.b16 %v816, %v815
        %v845 = vpack.c.b16 %v818, %v817
        %v846 = vpack.c.b16 %v820, %v819
        %v847 = vpack.c.b16 %v822, %v821
        %v848 = vpack.c.b16 %v824, %v823
        %v849 = vpack.c.b16 %v826, %v825
        %v850 = vpack.c.b16 %v828, %v827
        %v851 = vpack.c.b16 %v830, %v829
        %v852 = vpack.c.b16 %v832, %v831
        %v853 = vpack.c.b16 %v834, %v833
        %v854 = vpack.c.b16 %v836, %v835
        %v855 = vpack.c.b16 %v838, %v837
        %v856 = vpack.c.b16 %v840, %v839
        %873 = vmatprep.subr.bf16.mxu0 0
        %874 = vmatpush1.bf16.msra.mxu0 %v841
        %875 = vmatprep.subr.bf16.mxu0 0
        %876 = vmatpush1.bf16.msra.mxu0 %v842
        %877 = vmatprep.subr.bf16.mxu0 0
        %878 = vmatpush1.bf16.msra.mxu0 %v843
        %879 = vmatprep.subr.bf16.mxu0 0
        %880 = vmatpush1.bf16.msra.mxu0 %v844
        %881 = vmatprep.subr.bf16.mxu0 0
        %882 = vmatpush1.bf16.msra.mxu0 %v845
        %883 = vmatprep.subr.bf16.mxu0 0
        %884 = vmatpush1.bf16.msra.mxu0 %v846
        %885 = vmatprep.subr.bf16.mxu0 0
        %886 = vmatpush1.bf16.msra.mxu0 %v847
        %887 = vmatprep.subr.bf16.mxu0 0
        %888 = vmatpush1.bf16.msra.mxu0 %v848
        %889 = vmatprep.subr.bf16.mxu0 0
        %890 = vmatpush1.bf16.msra.mxu0 %v849
        %891 = vmatprep.subr.bf16.mxu0 0
        %892 = vmatpush1.bf16.msra.mxu0 %v850
        %893 = vmatprep.subr.bf16.mxu0 0
        %894 = vmatpush1.bf16.msra.mxu0 %v851
        %895 = vmatprep.subr.bf16.mxu0 0
        %896 = vmatpush1.bf16.msra.mxu0 %v852
        %897 = vmatprep.subr.bf16.mxu0 0
        %898 = vmatpush1.bf16.msra.mxu0 %v853
        %899 = vmatprep.subr.bf16.mxu0 0
        %900 = vmatpush1.bf16.msra.mxu0 %v854
        %901 = vmatprep.subr.bf16.mxu0 0
        %902 = vmatpush1.bf16.msra.mxu0 %v855
        %903 = vmatprep.subr.bf16.mxu0 0
        %904 = vmatpush1.bf16.msra.mxu0 %v856
        %905 = vmatprep.mubr.bf16.mxu0 %v693
        %906 = vmatmul.mubr.bf16.gmra.mrb[0].mxu0 %v735
        %v907 = vpop.f32.mrb[0].mxu0
        %v908 = vadd.f32 %v775, %v907
        %v909 = vpop.f32.mrb[0].mxu0
        %v910 = vpop.f32.mrb[0].mxu0
        %v911 = vadd.f32 %v775, %v910
        %v912 = vpop.f32.mrb[0].mxu0
        %913 = vdwg.mxu0
        %v914 = vmax.f32 %v908, 0.0
        %v915 = vmax.f32 %v911, 0.0
        %v916 = vadd.f32 %v691, %v914
        %v917 = vadd.f32 %v692, %v915
        %v918 = vpack.c.bf16 %v917, %v916
        %919 = vmatprep.subr.bf16.mxu0 0
        %920 = vmatpush1.bf16.msra.mxu0 %v918
        %921 = vmatprep.subr.bf16.mxu0 0
        %922 = vmatpush1.bf16.msra.mxu0 0
        %923 = vmatprep.subr.bf16.mxu0 0
        %924 = vmatpush1.bf16.msra.mxu0 0
        %925 = vmatprep.subr.bf16.mxu0 0
        %926 = vmatpush1.bf16.msra.mxu0 0
        %927 = vmatprep.subr.bf16.mxu0 0
        %928 = vmatpush1.bf16.msra.mxu0 0
        %929 = vmatprep.subr.bf16.mxu0 0
        %930 = vmatpush1.bf16.msra.mxu0 0
        %931 = vmatprep.subr.bf16.mxu0 0
        %932 = vmatpush1.bf16.msra.mxu0 0
        %933 = vmatprep.subr.bf16.mxu0 0
        %934 = vmatpush1.bf16.msra.mxu0 0
        %935 = vmatprep.subr.bf16.mxu0 0
        %936 = vmatpush1.bf16.msra.mxu0 0
        %937 = vmatprep.subr.bf16.mxu0 0
        %938 = vmatpush1.bf16.msra.mxu0 0
        %939 = vmatprep.subr.bf16.mxu0 0
        %940 = vmatpush1.bf16.msra.mxu0 0
        %941 = vmatprep.subr.bf16.mxu0 0
        %942 = vmatpush1.bf16.msra.mxu0 0
        %943 = vmatprep.subr.bf16.mxu0 0
        %944 = vmatpush1.bf16.msra.mxu0 0
        %945 = vmatprep.subr.bf16.mxu0 0
        %946 = vmatpush1.bf16.msra.mxu0 0
        %947 = vmatprep.subr.bf16.mxu0 0
        %948 = vmatpush1.bf16.msra.mxu0 0
        %949 = vmatprep.subr.bf16.mxu0 0
        %950 = vmatpush1.bf16.msra.mxu0 0
        %951 = vmatprep.mubr.bf16.mxu0 0
        %952 = vmatmul.mubr.bf16.gmra.mrb[0].mxu0 %v469
        %v953 = vpop.f32.mrb[0].mxu0
        %v954 = vadd.f32 0.0, %v953
        %v955 = vpop.f32.mrb[0].mxu0
        %v956 = vpop.f32.mrb[0].mxu0
        %v957 = vadd.f32 0.0, %v956
        %v958 = vpop.f32.mrb[0].mxu0
        %959 = vdwg.mxu0
        %v960 = vpack.c.bf16 %v957, %v954
        %s961 = scalar_lea.vmem [#allocation2], 256
        %v962 = vld [vmem:[%s961] sm:$0xf]
        %v963 = vld [vmem:[%s961 + $0x4] sm:$0xf]
        %v964 = vld [vmem:[%s961 + $0x8] sm:$0xf]
        %v965 = vld [vmem:[%s961 + $0xc] sm:$0xf]
        %v966 = vld [vmem:[%s961 + $0x10] sm:$0xf]
        %v967 = vld [vmem:[%s961 + $0x14] sm:$0xf]
        %v968 = vld [vmem:[%s961 + $0x18] sm:$0xf]
        %v969 = vld [vmem:[%s961 + $0x1c] sm:$0xf]
        %v970 = vld [vmem:[%s961 + $0x20] sm:$0xf]
        %v971 = vld [vmem:[%s961 + $0x24] sm:$0xf]
        %v972 = vld [vmem:[%s961 + $0x28] sm:$0xf]
        %v973 = vld [vmem:[%s961 + $0x2c] sm:$0xf]
        %v974 = vld [vmem:[%s961 + $0x30] sm:$0xf]
        %v975 = vld [vmem:[%s961 + $0x34] sm:$0xf]
        %v976 = vld [vmem:[%s961 + $0x38] sm:$0xf]
        %v977 = vld [vmem:[%s961 + $0x3c] sm:$0xf]
        %v978 = vld [vmem:[%s961 + $0x40] sm:$0xf]
        %v979 = vld [vmem:[%s961 + $0x44] sm:$0xf]
        %v980 = vld [vmem:[%s961 + $0x48] sm:$0xf]
        %v981 = vld [vmem:[%s961 + $0x4c] sm:$0xf]
        %v982 = vld [vmem:[%s961 + $0x50] sm:$0xf]
        %v983 = vld [vmem:[%s961 + $0x54] sm:$0xf]
        %v984 = vld [vmem:[%s961 + $0x58] sm:$0xf]
        %v985 = vld [vmem:[%s961 + $0x5c] sm:$0xf]
        %v986 = vld [vmem:[%s961 + $0x60] sm:$0xf]
        %v987 = vld [vmem:[%s961 + $0x64] sm:$0xf]
        %v988 = vld [vmem:[%s961 + $0x68] sm:$0xf]
        %v989 = vld [vmem:[%s961 + $0x6c] sm:$0xf]
        %v990 = vld [vmem:[%s961 + $0x70] sm:$0xf]
        %v991 = vld [vmem:[%s961 + $0x74] sm:$0xf]
        %v992 = vld [vmem:[%s961 + $0x78] sm:$0xf]
        %v993 = vld [vmem:[%s961 + $0x7c] sm:$0xf]
        %s994 = scalar_lea.vmem %s5, 2
        %v995 = vld [vmem:[%s994] sm:$0x1]
        %v997 = vlaneseq
        %v998 = vshrl.u32 %v997, 7
        %v999 = vsub.s32 0, %v998
        %v1000 = vrot.slane %v995, %v999
        %v1034 = vunpack.c.l.b16 %v962
        %v1035 = vunpack.c.l.b16 %v963
        %v1036 = vunpack.c.l.b16 %v964
        %v1037 = vunpack.c.l.b16 %v965
        %v1038 = vunpack.c.l.b16 %v966
        %v1039 = vunpack.c.l.b16 %v967
        %v1040 = vunpack.c.l.b16 %v968
        %v1041 = vunpack.c.l.b16 %v969
        %v1042 = vunpack.c.l.b16 %v970
        %v1043 = vunpack.c.l.b16 %v971
        %v1044 = vunpack.c.l.b16 %v972
        %v1045 = vunpack.c.l.b16 %v973
        %v1046 = vunpack.c.l.b16 %v974
        %v1047 = vunpack.c.l.b16 %v975
        %v1048 = vunpack.c.l.b16 %v976
        %v1049 = vunpack.c.l.b16 %v977
        %v1050 = vunpack.c.l.b16 %v978
        %v1051 = vunpack.c.l.b16 %v979
        %v1052 = vunpack.c.l.b16 %v980
        %v1053 = vunpack.c.l.b16 %v981
        %v1054 = vunpack.c.l.b16 %v982
        %v1055 = vunpack.c.l.b16 %v983
        %v1056 = vunpack.c.l.b16 %v984
        %v1057 = vunpack.c.l.b16 %v985
        %v1058 = vunpack.c.l.b16 %v986
        %v1059 = vunpack.c.l.b16 %v987
        %v1060 = vunpack.c.l.b16 %v988
        %v1061 = vunpack.c.l.b16 %v989
        %v1062 = vunpack.c.l.b16 %v990
        %v1063 = vunpack.c.l.b16 %v991
        %v1064 = vunpack.c.l.b16 %v992
        %v1065 = vunpack.c.l.b16 %v993
        %v1066 = vpack.c.b16 %v1035, %v1034
        %v1067 = vpack.c.b16 %v1037, %v1036
        %v1068 = vpack.c.b16 %v1039, %v1038
        %v1069 = vpack.c.b16 %v1041, %v1040
        %v1070 = vpack.c.b16 %v1043, %v1042
        %v1071 = vpack.c.b16 %v1045, %v1044
        %v1072 = vpack.c.b16 %v1047, %v1046
        %v1073 = vpack.c.b16 %v1049, %v1048
        %v1074 = vpack.c.b16 %v1051, %v1050
        %v1075 = vpack.c.b16 %v1053, %v1052
        %v1076 = vpack.c.b16 %v1055, %v1054
        %v1077 = vpack.c.b16 %v1057, %v1056
        %v1078 = vpack.c.b16 %v1059, %v1058
        %v1079 = vpack.c.b16 %v1061, %v1060
        %v1080 = vpack.c.b16 %v1063, %v1062
        %v1081 = vpack.c.b16 %v1065, %v1064
        %1098 = vmatprep.subr.bf16.mxu0 0
        %1099 = vmatpush1.bf16.msra.mxu0 %v1066
        %1100 = vmatprep.subr.bf16.mxu0 0
        %1101 = vmatpush1.bf16.msra.mxu0 %v1067
        %1102 = vmatprep.subr.bf16.mxu0 0
        %1103 = vmatpush1.bf16.msra.mxu0 %v1068
        %1104 = vmatprep.subr.bf16.mxu0 0
        %1105 = vmatpush1.bf16.msra.mxu0 %v1069
        %1106 = vmatprep.subr.bf16.mxu0 0
        %1107 = vmatpush1.bf16.msra.mxu0 %v1070
        %1108 = vmatprep.subr.bf16.mxu0 0
        %1109 = vmatpush1.bf16.msra.mxu0 %v1071
        %1110 = vmatprep.subr.bf16.mxu0 0
        %1111 = vmatpush1.bf16.msra.mxu0 %v1072
        %1112 = vmatprep.subr.bf16.mxu0 0
        %1113 = vmatpush1.bf16.msra.mxu0 %v1073
        %1114 = vmatprep.subr.bf16.mxu0 0
        %1115 = vmatpush1.bf16.msra.mxu0 %v1074
        %1116 = vmatprep.subr.bf16.mxu0 0
        %1117 = vmatpush1.bf16.msra.mxu0 %v1075
        %1118 = vmatprep.subr.bf16.mxu0 0
        %1119 = vmatpush1.bf16.msra.mxu0 %v1076
        %1120 = vmatprep.subr.bf16.mxu0 0
        %1121 = vmatpush1.bf16.msra.mxu0 %v1077
        %1122 = vmatprep.subr.bf16.mxu0 0
        %1123 = vmatpush1.bf16.msra.mxu0 %v1078
        %1124 = vmatprep.subr.bf16.mxu0 0
        %1125 = vmatpush1.bf16.msra.mxu0 %v1079
        %1126 = vmatprep.subr.bf16.mxu0 0
        %1127 = vmatpush1.bf16.msra.mxu0 %v1080
        %1128 = vmatprep.subr.bf16.mxu0 0
        %1129 = vmatpush1.bf16.msra.mxu0 %v1081
        %1130 = vmatprep.mubr.bf16.mxu0 %v918
        %1131 = vmatmul.mubr.bf16.gmra.mrb[0].mxu0 %v960
        %v1132 = vpop.f32.mrb[0].mxu0
        %v1133 = vadd.f32 %v1000, %v1132
        %v1134 = vpop.f32.mrb[0].mxu0
        %v1135 = vpop.f32.mrb[0].mxu0
        %v1136 = vadd.f32 %v1000, %v1135
        %v1137 = vpop.f32.mrb[0].mxu0
        %1138 = vdwg.mxu0
        %v1139 = vmax.f32 %v1133, 0.0
        %v1140 = vmax.f32 %v1136, 0.0
        %v1141 = vadd.f32 %v916, %v1139
        %v1142 = vadd.f32 %v917, %v1140
        %v1143 = vadd.f32 %v1141, %v1142
        %v1144 = vrot.slane %v1143, 4
        %v1145 = vadd.f32 %v1143, %v1144
        %v1146 = vrot.slane %v1145, 2
        %v1147 = vadd.f32 %v1145, %v1146
        %v1148 = vrot.slane %v1147, 1
        %v1149 = vadd.f32 %v1147, %v1148
        %v1150 = vmul.f32 %v1149, 0.0625
        %v1151 = vpack.c.bf16 %v1150, %v1150
        %v1152 = vld [vmem:[%s6] sm:$0xf]
        %v1153 = vld [vmem:[%s6 + $0x4] sm:$0xf]
        %v1154 = vld [vmem:[%s6 + $0x8] sm:$0xf]
        %v1155 = vld [vmem:[%s6 + $0xc] sm:$0xf]
        %v1156 = vld [vmem:[%s6 + $0x10] sm:$0xf]
        %v1157 = vld [vmem:[%s6 + $0x14] sm:$0xf]
        %v1158 = vld [vmem:[%s6 + $0x18] sm:$0xf]
        %v1159 = vld [vmem:[%s6 + $0x1c] sm:$0xf]
        %v1160 = vld [vmem:[%s6 + $0x20] sm:$0xf]
        %v1161 = vld [vmem:[%s6 + $0x24] sm:$0xf]
        %v1162 = vld [vmem:[%s6 + $0x28] sm:$0xf]
        %v1163 = vld [vmem:[%s6 + $0x2c] sm:$0xf]
        %v1164 = vld [vmem:[%s6 + $0x30] sm:$0xf]
        %v1165 = vld [vmem:[%s6 + $0x34] sm:$0xf]
        %v1166 = vld [vmem:[%s6 + $0x38] sm:$0xf]
        %v1167 = vld [vmem:[%s6 + $0x3c] sm:$0xf]
        %v1168 = vld [vmem:[%s7] sm:$0x1]
        %v1185 = vunpack.c.l.b16 %v1152
        %v1186 = vunpack.c.l.b16 %v1153
        %v1187 = vunpack.c.l.b16 %v1154
        %v1188 = vunpack.c.l.b16 %v1155
        %v1189 = vunpack.c.l.b16 %v1156
        %v1190 = vunpack.c.l.b16 %v1157
        %v1191 = vunpack.c.l.b16 %v1158
        %v1192 = vunpack.c.l.b16 %v1159
        %v1193 = vunpack.c.l.b16 %v1160
        %v1194 = vunpack.c.l.b16 %v1161
        %v1195 = vunpack.c.l.b16 %v1162
        %v1196 = vunpack.c.l.b16 %v1163
        %v1197 = vunpack.c.l.b16 %v1164
        %v1198 = vunpack.c.l.b16 %v1165
        %v1199 = vunpack.c.l.b16 %v1166
        %v1200 = vunpack.c.l.b16 %v1167
        %v1201 = vpack.c.b16 %v1186, %v1185
        %v1202 = vpack.c.b16 %v1188, %v1187
        %v1203 = vpack.c.b16 %v1190, %v1189
        %v1204 = vpack.c.b16 %v1192, %v1191
        %v1205 = vpack.c.b16 %v1194, %v1193
        %v1206 = vpack.c.b16 %v1196, %v1195
        %v1207 = vpack.c.b16 %v1198, %v1197
        %v1208 = vpack.c.b16 %v1200, %v1199
        %1217 = vmatprep.subr.bf16.mxu0 0
        %1218 = vmatpush1.bf16.msra.mxu0 %v1201
        %1219 = vmatprep.subr.bf16.mxu0 0
        %1220 = vmatpush1.bf16.msra.mxu0 %v1202
        %1221 = vmatprep.subr.bf16.mxu0 0
        %1222 = vmatpush1.bf16.msra.mxu0 %v1203
        %1223 = vmatprep.subr.bf16.mxu0 0
        %1224 = vmatpush1.bf16.msra.mxu0 %v1204
        %1225 = vmatprep.subr.bf16.mxu0 0
        %1226 = vmatpush1.bf16.msra.mxu0 %v1205
        %1227 = vmatprep.subr.bf16.mxu0 0
        %1228 = vmatpush1.bf16.msra.mxu0 %v1206
        %1229 = vmatprep.subr.bf16.mxu0 0
        %1230 = vmatpush1.bf16.msra.mxu0 %v1207
        %1231 = vmatprep.subr.bf16.mxu0 0
        %1232 = vmatpush1.bf16.msra.mxu0 %v1208
        %1233 = vmatprep.subr.bf16.mxu0 0
        %1234 = vmatpush1.bf16.msra.mxu0 0
        %1235 = vmatprep.subr.bf16.mxu0 0
        %1236 = vmatpush1.bf16.msra.mxu0 0
        %1237 = vmatprep.subr.bf16.mxu0 0
        %1238 = vmatpush1.bf16.msra.mxu0 0
        %1239 = vmatprep.subr.bf16.mxu0 0
        %1240 = vmatpush1.bf16.msra.mxu0 0
        %1241 = vmatprep.subr.bf16.mxu0 0
        %1242 = vmatpush1.bf16.msra.mxu0 0
        %1243 = vmatprep.subr.bf16.mxu0 0
        %1244 = vmatpush1.bf16.msra.mxu0 0
        %1245 = vmatprep.subr.bf16.mxu0 0
        %1246 = vmatpush1.bf16.msra.mxu0 0
        %1247 = vmatprep.subr.bf16.mxu0 0
        %1248 = vmatpush1.bf16.msra.mxu0 0
        %1249 = vmatprep.mubr.bf16.mxu0 0
        %1250 = vmatmul.mubr.bf16.gmra.mrb[0].mxu0 %v1151
        %v1251 = vpop.f32.mrb[0].mxu0
        %v1252 = vadd.f32 %v1168, %v1251
        %v1253 = vpop.f32.mrb[0].mxu0
        %v1254 = vpop.f32.mrb[0].mxu0
        %v1255 = vpop.f32.mrb[0].mxu0
        %1256 = vdwg.mxu0
        %1257 = vst [vmem:[%s327] sm:$0x1] %v1252
        %s1258 = sand.u32 %s209, 1
        %s1259 = scalar_lea.sflag [#allocation4], %s1258
        %s1260 = sand.u32 %s209, 1
        %s1261 = scalar_lea.vmem [#allocation5], %s1260
        // Predicated region
        $region57: #{model_train_forward.1} parent=51 // pred_check
          %p1262 = pneg %p219
        $region58: #{model_train_forward.1} parent=51 // pred_check_branch
          %1264 = sbr.rel (%p1262) target = $region60
        $region59: #{model_train_forward.1} parent=51 // pred_region
          %s1266 = ssub.s32 16, 16
          %1267 = vsyncadd %s1259, %s1266
          %s1268 = smul.addr %s23, 16
          %s1269 = scalar_lea.hbm %s8, %s1268
          %s1271 = sshll.u32 %s1261, 4
          %s1272 = int_to_ptr.vmem [resolvable:$true] %s1271
          %1274 = dma.vmem_to_hbm [thread:$0]  %s1272, 16, %s1269, %s1259
        $region60: #{model_train_forward.1} parent=51 // pred_fallthru
          _
      $region52: #{model_train_forward.1} parent=5 // pred_fallthru
        _
      %p1275 = scmp.le.s32.totalorder 2, %s18
      // Predicated region
      $region61: #{model_train_forward.1} parent=5 // pred_check
        %p1276 = pneg %p1275
      $region62: #{model_train_forward.1} parent=5 // pred_check_branch
        %1278 = sbr.rel (%p1276) target = $region64
      $region63: #{model_train_forward.1} parent=5 // pred_region
        %s1279 = ssub.s32 %s18, 2
        // Predicated region
        $region65: #{model_train_forward.1} parent=63 // pred_check
          %p1280 = pneg %p225
        $region66: #{model_train_forward.1} parent=63 // pred_check_branch
          %1282 = sbr.rel (%p1280) target = $region68
        $region67: #{model_train_forward.1} parent=63 // pred_region
          %s1283 = sand.u32 %s210, 1
          %s1284 = scalar_lea.sflag [#allocation4], %s1283
          %s1285 = sand.u32 %s210, 1
          %s1286 = scalar_lea.vmem [#allocation5], %s1285
          %1287 = dma.done %s1284, 16
        $region68: #{model_train_forward.1} parent=63 // pred_fallthru
          _
      $region64: #{model_train_forward.1} parent=5 // pred_fallthru
        _
    $region6: #{model_train_forward.1} parent=1 // loop_footer
      %s22 = sadd.s32 1, %s18
    $region7: #{model_train_forward.1} parent=1 // loop_footer_branch
      %17 = sbr.rel target = $region3
    $region8: #{model_train_forward.1} parent=1 // loop_exit
      _
    %1288 = vsyncpa [#allocation3], 1
    %s1289 = scalar_lea.sflag [#allocation3], 1
    %1290 = vsyncpa %s1289, 1
    %1291 = vsyncpa [#allocation4], 1
    %s1292 = scalar_lea.sflag [#allocation4], 1
    %1293 = vsyncpa %s1292, 1

</llo_original>
